<compile_context>
chip_gen: v7x
topology: tpu7x:2x2x1
jax: 0.10.0
libtpu: 0.0.40
codegen_flags: <defaults>
</compile_context>

<pallas_src>
import jax
import jax.numpy as jnp
from jax import lax
from jax.experimental import pallas as pl
from jax.experimental.pallas import tpu as pltpu


def _round_up(x, m):
    return (x + m - 1) // m * m


def _tagger_kernel(x_ref, w_ref, b_ref, labels_ref, mask_ref,
                   score_ref, prob_ref, preds_ref, loss_part_ref):
    # final_mlp: (TILE, H) @ (H, Q) + (1, Q). bf16 operands feed the MXU
    # directly; accumulation is f32.
    z = jnp.dot(x_ref[...], w_ref[...],
                preferred_element_type=jnp.float32) + b_ref[...]
    score_ref[...] = z

    mask = mask_ref[...]                                   # (TILE, 1) f32

    # softmax(z, -1) * mask  (stable log-sum-exp form; f32 elementwise math).
    m = jnp.max(z, axis=-1, keepdims=True)
    e = jnp.exp(z - m)
    s = jnp.sum(e, axis=-1, keepdims=True)
    inv_s = pl.reciprocal(s, approx=True)                  # EUP slot, ~free
    prob_ref[...] = e * inv_s * mask

    # Fused argmax(prob, -1): first maximal index; masked rows -> 0
    # (softmax * 0 is an all-zero row, torch argmax returns index 0).
    q = z.shape[-1]
    q_iota = lax.broadcasted_iota(jnp.int32, z.shape, 1)
    cand = jnp.where(z >= m, q_iota.astype(jnp.float32), jnp.float32(q))
    preds = jnp.min(cand, axis=-1, keepdims=True).astype(jnp.int32)
    preds_ref[...] = jnp.where(mask > 0.0, preds, 0)

    # Masked cross-entropy partial sum for this tile: sum(lse - z[label]).
    lse = jnp.log(s) + m                                   # (TILE, 1)
    onehot = q_iota == labels_ref[...]
    label_logit = jnp.sum(jnp.where(onehot, z, 0.0), axis=-1, keepdims=True)
    per_row = (lse - label_logit) * mask
    loss_part_ref[...] = jnp.sum(per_row).reshape(1, 1, 1)


def tagger_forward(seq_encoder_reprs, w, b, joint_label_matrix,
                   joint_label_matrix_mask, *, tile_rows=None):
    """Pallas implementation of Tagger.forward (numeric parts)."""
    B, S, H = seq_encoder_reprs.shape
    Q = w.shape[1]
    rows = B * S

    # Tile sizing: biggest reasonable row tile (mem/overhead-bound kernel).
    # 512 rows x H=1024 bf16 is ~1 MiB/buffer -> well under v7x's 64 MiB VMEM
    # even double-buffered. Align to 16 rows (bf16 sublane packing).
    if tile_rows is None:
        tile_rows = 512 if rows >= 512 else _round_up(rows, 16)
    tile_rows = _round_up(tile_rows, 16)
    rows_p = _round_up(rows, tile_rows)
    num_tiles = rows_p // tile_rows

    # Glue: diagonal extraction (torch .diagonal(dim1=1, dim2=2)) + reshapes.
    mask_diag = jnp.diagonal(joint_label_matrix_mask, axis1=1, axis2=2)  # (B,S)
    labels_diag = jnp.diagonal(joint_label_matrix, axis1=1, axis2=2)     # (B,S)

    # Keep x / W in their native dtype (bf16 straight to the MXU); no f32 cast.
    x2d = seq_encoder_reprs.reshape(rows, H)
    labels2d = labels_diag.reshape(rows, 1).astype(jnp.int32)
    mask2d = mask_diag.reshape(rows, 1).astype(jnp.float32)
    b2d = b.reshape(1, Q).astype(jnp.float32)

    pad = rows_p - rows
    if pad:
        x2d = jnp.pad(x2d, ((0, pad), (0, 0)))
        labels2d = jnp.pad(labels2d, ((0, pad), (0, 0)))
        mask2d = jnp.pad(mask2d, ((0, pad), (0, 0)))   # padded rows masked out

    score, prob, preds, loss_part = pl.pallas_call(
        _tagger_kernel,
        out_shape=(
            jax.ShapeDtypeStruct((rows_p, Q), jnp.float32),       # joint_score
            jax.ShapeDtypeStruct((rows_p, Q), jnp.float32),       # softmax*mask
            jax.ShapeDtypeStruct((rows_p, 1), jnp.int32),         # argmax preds
            jax.ShapeDtypeStruct((num_tiles, 1, 1), jnp.float32), # CE partials
        ),
        grid_spec=pltpu.PrefetchScalarGridSpec(
            num_scalar_prefetch=0,
            grid=(num_tiles,),
            in_specs=[
                pl.BlockSpec((tile_rows, H), lambda i: (i, 0)),
                pl.BlockSpec((H, Q), lambda i: (0, 0)),
                pl.BlockSpec((1, Q), lambda i: (0, 0)),
                pl.BlockSpec((tile_rows, 1), lambda i: (i, 0)),
                pl.BlockSpec((tile_rows, 1), lambda i: (i, 0)),
            ],
            out_specs=[
                pl.BlockSpec((tile_rows, Q), lambda i: (i, 0)),
                pl.BlockSpec((tile_rows, Q), lambda i: (i, 0)),
                pl.BlockSpec((tile_rows, 1), lambda i: (i, 0)),
                pl.BlockSpec((1, 1, 1), lambda i: (i, 0, 0)),
            ],
        ),
        compiler_params=pltpu.CompilerParams(
            dimension_semantics=("parallel",),        # no resident accumulator
            vmem_limit_bytes=32 * 1024 * 1024,        # headroom on v7x (64 MiB)
        ),
    )(x2d, w, b2d, labels2d, mask2d)

    joint_score = score[:rows].reshape(B, S, Q)
    normalized_joint_score = prob[:rows].reshape(B, S, Q)

    count = jnp.sum(mask2d)
    loss = jnp.sum(loss_part) / jnp.maximum(count, 1.0)   # guard all-masked

    preds_bs = preds[:rows, 0].reshape(B, S)
    joint_label_preds = jax.vmap(jnp.diag)(preds_bs)      # torch.diag_embed

    return {
        "loss": loss,
        "joint_score": joint_score,
        "joint_label_preds": joint_label_preds,
        "normalized_joint_score": normalized_joint_score,
    }


def _reference(seq_encoder_reprs, w, b, joint_label_matrix, mask3d):
    """Pure-jnp reference mirroring the PyTorch semantics."""
    z = jnp.einsum("bsh,hq->bsq", seq_encoder_reprs, w,
                   preferred_element_type=jnp.float32) + b
    mask = jnp.diagonal(mask3d, axis1=1, axis2=2)                # (B, S) bool
    labels = jnp.diagonal(joint_label_matrix, axis1=1, axis2=2)  # (B, S)
    prob = jax.nn.softmax(z, axis=-1) * mask[..., None].astype(jnp.float32)
    lse = jax.nn.logsumexp(z, axis=-1)
    label_logit = jnp.take_along_axis(z, labels[..., None], axis=-1)[..., 0]
    ce = lse - label_logit
    fmask = mask.astype(jnp.float32)
    loss = jnp.sum(ce * fmask) / jnp.sum(fmask)
    preds = jnp.argmax(prob, axis=-1)
    return z, prob, loss, preds


if __name__ == "__main__":
    B, S, H, Q = 2, 16, 32, 8   # batch, seq, hidden, q_num_logits

    key = jax.random.PRNGKey(0)
    k_x, k_w, k_b, k_lbl = jax.random.split(key, 4)

    # Encoder output / final_mlp weights in bf16 (feeds the MXU directly).
    seq_encoder_reprs = jax.random.normal(k_x, (B, S, H)).astype(jnp.bfloat16)
    w = (jax.random.normal(k_w, (H, Q)) * 0.05).astype(jnp.bfloat16)
    b = (jax.random.normal(k_b, (Q,)) * 0.01).astype(jnp.float32)

    # joint_label_matrix: (B, S, S) int labels; mask valid up to tokens_lens.
    joint_label_matrix = jax.random.randint(k_lbl, (B, S, S), 0, Q, dtype=jnp.int32)
    tokens_lens = jnp.array([16, 9], dtype=jnp.int32)
    pos = jnp.arange(S)
    valid = pos[None, :] < tokens_lens[:, None]                      # (B, S)
    joint_label_matrix_mask = valid[:, :, None] & valid[:, None, :]  # (B, S, S)

    z_ref, prob_ref, loss_ref, preds_ref = _reference(
        seq_encoder_reprs, w, b, joint_label_matrix, joint_label_matrix_mask)
    preds_diag_ref = jax.vmap(jnp.diag)(preds_ref)

    # Auto tile (single tile here) and an explicit multi-tile run (grid=2),
    # exercising the parallel grid axis + per-tile CE partial reduction.
    for tr in (None, 16):
        out = tagger_forward(seq_encoder_reprs, w, b,
                             joint_label_matrix, joint_label_matrix_mask,
                             tile_rows=tr)
        jax.block_until_ready(out)

        assert jnp.allclose(out["joint_score"], z_ref, atol=2e-3, rtol=2e-3)
        assert jnp.allclose(out["normalized_joint_score"], prob_ref,
                            atol=1e-2, rtol=1e-2)
        assert jnp.allclose(out["loss"], loss_ref, atol=2e-3, rtol=2e-3)
        assert jnp.array_equal(out["joint_label_preds"], preds_diag_ref)

    print("KERNEL_OK")
</pallas_src>

<mosaic_0001>
module attributes {stable_mosaic.version = 11 : i64} {
  func.func @_tagger_kernel(%arg0: i32, %arg1: memref<32x32xbf16, #tpu.memory_space<vmem>>, %arg2: memref<32x8xbf16, #tpu.memory_space<vmem>>, %arg3: memref<1x8xf32, #tpu.memory_space<vmem>>, %arg4: memref<32x1xi32, #tpu.memory_space<vmem>>, %arg5: memref<32x1xf32, #tpu.memory_space<vmem>>, %arg6: memref<32x8xf32, #tpu.memory_space<vmem>>, %arg7: memref<32x8xf32, #tpu.memory_space<vmem>>, %arg8: memref<32x1xi32, #tpu.memory_space<vmem>>, %arg9: memref<1x1x1xf32, #tpu.memory_space<vmem>>) attributes {dimension_semantics = [#tpu.dimension_semantics<parallel>], iteration_bounds = array<i64: 1>, scalar_prefetch = 0 : i64, scratch_operands = 0 : i64, tpu.core_type = #tpu.core_type<tc>, window_params = [{transform_indices = @transform_0, window_bounds = array<i64: 32, 32>}, {pipeline_mode = #tpu.pipeline_mode<synchronous>, transform_indices = @transform_1, window_bounds = array<i64: 32, 8>}, {pipeline_mode = #tpu.pipeline_mode<synchronous>, transform_indices = @transform_2, window_bounds = array<i64: 1, 8>}, {transform_indices = @transform_3, window_bounds = array<i64: 32, 1>}, {transform_indices = @transform_4, window_bounds = array<i64: 32, 1>}, {transform_indices = @transform_5, window_bounds = array<i64: 32, 8>}, {transform_indices = @transform_6, window_bounds = array<i64: 32, 8>}, {transform_indices = @transform_7, window_bounds = array<i64: 32, 1>}, {transform_indices = @transform_8, window_bounds = array<i64: 1, 1, 1>}]} {
    %c0 = arith.constant 0 : index
    %c0_0 = arith.constant 0 : index
    %0 = vector.load %arg1[%c0, %c0_0] : memref<32x32xbf16, #tpu.memory_space<vmem>>, vector<32x32xbf16>
    %c0_1 = arith.constant 0 : index
    %c0_2 = arith.constant 0 : index
    %1 = vector.load %arg2[%c0_1, %c0_2] : memref<32x8xbf16, #tpu.memory_space<vmem>>, vector<32x8xbf16>
    %cst = arith.constant dense<0.000000e+00> : vector<32x8xf32>
    %2 = tpu.matmul %0, %1, %cst {dimension_numbers = #tpu.dot_dimension_numbers<[1], [0], [0], [1], [0, 0, 1, 1], [], []>} : vector<32x32xbf16>, vector<32x8xbf16>, vector<32x8xf32> -> vector<32x8xf32>
    %c0_3 = arith.constant 0 : index
    %c0_4 = arith.constant 0 : index
    %3 = vector.load %arg3[%c0_3, %c0_4] : memref<1x8xf32, #tpu.memory_space<vmem>>, vector<1x8xf32>
    %4 = vector.broadcast %3 : vector<1x8xf32> to vector<32x8xf32>
    %5 = arith.addf %2, %4 : vector<32x8xf32>
    %c0_5 = arith.constant 0 : index
    %c0_6 = arith.constant 0 : index
    %6 = vector.load %arg6[%c0_5, %c0_6] : memref<32x8xf32, #tpu.memory_space<vmem>>, vector<32x8xf32>
    tpu.vector_store %arg6[%c0_5, %c0_6], %5 {strides = array<i32>} : memref<32x8xf32, #tpu.memory_space<vmem>>, vector<32x8xf32>,
    %c0_7 = arith.constant 0 : index
    %c0_8 = arith.constant 0 : index
    %7 = vector.load %arg5[%c0_7, %c0_8] : memref<32x1xf32, #tpu.memory_space<vmem>>, vector<32x1xf32>
    %cst_9 = arith.constant dense<0xFF800000> : vector<32xf32>
    %8 = vector.multi_reduction <maximumf>, %5, %cst_9 [1] : vector<32x8xf32> to vector<32xf32>
    %9 = vector.shape_cast %8 : vector<32xf32> to vector<32x1xf32>
    %10 = vector.broadcast %9 : vector<32x1xf32> to vector<32x8xf32>
    %11 = arith.subf %5, %10 : vector<32x8xf32>
    %12 = math.exp %11 : vector<32x8xf32>
    %cst_10 = arith.constant dense<0.000000e+00> : vector<32xf32>
    %13 = vector.multi_reduction <add>, %12, %cst_10 [1] : vector<32x8xf32> to vector<32xf32>
    %14 = vector.shape_cast %13 : vector<32xf32> to vector<32x1xf32>
    %15 = tpu.reciprocal %14 {approx = true} : vector<32x1xf32> -> vector<32x1xf32>
    %16 = vector.broadcast %15 : vector<32x1xf32> to vector<32x8xf32>
    %17 = arith.mulf %12, %16 : vector<32x8xf32>
    %18 = vector.broadcast %7 : vector<32x1xf32> to vector<32x8xf32>
    %19 = arith.mulf %17, %18 : vector<32x8xf32>
    %c0_11 = arith.constant 0 : index
    %c0_12 = arith.constant 0 : index
    %20 = vector.load %arg7[%c0_11, %c0_12] : memref<32x8xf32, #tpu.memory_space<vmem>>, vector<32x8xf32>
    tpu.vector_store %arg7[%c0_11, %c0_12], %19 {strides = array<i32>} : memref<32x8xf32, #tpu.memory_space<vmem>>, vector<32x8xf32>,
    %21 = tpu.iota {dimensions = array<i32: 1>} : vector<32x8xi32>
    %22 = vector.broadcast %9 : vector<32x1xf32> to vector<32x8xf32>
    %23 = arith.cmpf oge, %5, %22 : vector<32x8xf32>
    %24 = arith.sitofp %21 : vector<32x8xi32> to vector<32x8xf32>
    %cst_13 = arith.constant 8.000000e+00 : f32
    %25 = vector.broadcast %cst_13 : f32 to vector<32x8xf32>
    %26 = arith.select %23, %24, %25 : vector<32x8xi1>, vector<32x8xf32>
    %cst_14 = arith.constant dense<0x7F800000> : vector<32xf32>
    %27 = vector.multi_reduction <minimumf>, %26, %cst_14 [1] : vector<32x8xf32> to vector<32xf32>
    %28 = vector.shape_cast %27 : vector<32xf32> to vector<32x1xf32>
    %29 = arith.fptosi %28 : vector<32x1xf32> to vector<32x1xi32>
    %cst_15 = arith.constant 0.000000e+00 : f32
    %30 = vector.broadcast %cst_15 : f32 to vector<32x1xf32>
    %31 = arith.cmpf ogt, %7, %30 : vector<32x1xf32>
    %c0_i32 = arith.constant 0 : i32
    %32 = vector.broadcast %c0_i32 : i32 to vector<32x1xi32>
    %33 = arith.select %31, %29, %32 : vector<32x1xi1>, vector<32x1xi32>
    %c0_16 = arith.constant 0 : index
    %c0_17 = arith.constant 0 : index
    %34 = vector.load %arg8[%c0_16, %c0_17] : memref<32x1xi32, #tpu.memory_space<vmem>>, vector<32x1xi32>
    tpu.vector_store %arg8[%c0_16, %c0_17], %33 {strides = array<i32>} : memref<32x1xi32, #tpu.memory_space<vmem>>, vector<32x1xi32>,
    %35 = math.log %14 : vector<32x1xf32>
    %36 = arith.addf %35, %9 : vector<32x1xf32>
    %c0_18 = arith.constant 0 : index
    %c0_19 = arith.constant 0 : index
    %37 = vector.load %arg4[%c0_18, %c0_19] : memref<32x1xi32, #tpu.memory_space<vmem>>, vector<32x1xi32>
    %38 = vector.broadcast %37 : vector<32x1xi32> to vector<32x8xi32>
    %39 = arith.cmpi eq, %21, %38 : vector<32x8xi32>
    %cst_20 = arith.constant 0.000000e+00 : f32
    %40 = vector.broadcast %cst_20 : f32 to vector<32x8xf32>
    %41 = arith.select %39, %5, %40 : vector<32x8xi1>, vector<32x8xf32>
    %cst_21 = arith.constant dense<0.000000e+00> : vector<32xf32>
    %42 = vector.multi_reduction <add>, %41, %cst_21 [1] : vector<32x8xf32> to vector<32xf32>
    %43 = vector.shape_cast %42 : vector<32xf32> to vector<32x1xf32>
    %44 = arith.subf %36, %43 : vector<32x1xf32>
    %45 = arith.mulf %44, %7 : vector<32x1xf32>
    %46 = vector.shape_cast %45 : vector<32x1xf32> to vector<1x32x1xf32>
    %cst_22 = arith.constant dense<0.000000e+00> : vector<1xf32>
    %47 = vector.multi_reduction <add>, %46, %cst_22 [1, 2] : vector<1x32x1xf32> to vector<1xf32>
    %48 = vector.shape_cast %47 : vector<1xf32> to vector<1x1x1xf32>
    %49 = vector.extract %48[0, 0, 0] : f32 from vector<1x1x1xf32>
    %50 = vector.broadcast %49 : f32 to vector<1x1x1xf32>
    %c0_23 = arith.constant 0 : index
    %c0_24 = arith.constant 0 : index
    %c0_25 = arith.constant 0 : index
    %51 = vector.load %arg9[%c0_23, %c0_24, %c0_25] : memref<1x1x1xf32, #tpu.memory_space<vmem>>, vector<1x1x1xf32>
    tpu.vector_store %arg9[%c0_23, %c0_24, %c0_25], %50 {strides = array<i32>} : memref<1x1x1xf32, #tpu.memory_space<vmem>>, vector<1x1x1xf32>,
    return
  }
  func.func @transform_0(%arg0: i32) -> (i32, i32) {
    %c0_i32 = arith.constant 0 : i32
    %c0_i32_0 = arith.constant 0 : i32
    return %arg0, %c0_i32 : i32, i32
  }
  func.func @transform_1(%arg0: i32) -> (i32, i32) {
    %c0_i32 = arith.constant 0 : i32
    %c0_i32_0 = arith.constant 0 : i32
    %c0_i32_1 = arith.constant 0 : i32
    return %c0_i32, %c0_i32_0 : i32, i32
  }
  func.func @transform_2(%arg0: i32) -> (i32, i32) {
    %c0_i32 = arith.constant 0 : i32
    %c0_i32_0 = arith.constant 0 : i32
    %c0_i32_1 = arith.constant 0 : i32
    return %c0_i32, %c0_i32_0 : i32, i32
  }
  func.func @transform_3(%arg0: i32) -> (i32, i32) {
    %c0_i32 = arith.constant 0 : i32
    %c0_i32_0 = arith.constant 0 : i32
    return %arg0, %c0_i32 : i32, i32
  }
  func.func @transform_4(%arg0: i32) -> (i32, i32) {
    %c0_i32 = arith.constant 0 : i32
    %c0_i32_0 = arith.constant 0 : i32
    return %arg0, %c0_i32 : i32, i32
  }
  func.func @transform_5(%arg0: i32) -> (i32, i32) {
    %c0_i32 = arith.constant 0 : i32
    %c0_i32_0 = arith.constant 0 : i32
    return %arg0, %c0_i32 : i32, i32
  }
  func.func @transform_6(%arg0: i32) -> (i32, i32) {
    %c0_i32 = arith.constant 0 : i32
    %c0_i32_0 = arith.constant 0 : i32
    return %arg0, %c0_i32 : i32, i32
  }
  func.func @transform_7(%arg0: i32) -> (i32, i32) {
    %c0_i32 = arith.constant 0 : i32
    %c0_i32_0 = arith.constant 0 : i32
    return %arg0, %c0_i32 : i32, i32
  }
  func.func @transform_8(%arg0: i32) -> (i32, i32, i32) {
    %c0_i32 = arith.constant 0 : i32
    %c0_i32_0 = arith.constant 0 : i32
    %c0_i32_1 = arith.constant 0 : i32
    return %arg0, %c0_i32, %c0_i32_0 : i32, i32, i32
  }
}

</mosaic_0001>

<llo_original>
// kernel: tpu_custom_call.1
$region0: #{tpu_custom_call.1}
  #allocation0 [shape = 'u32[]', space=smem, size = 0x4, offset = 0x4, fixed_abs, tag = 'smem constant byte address 0x4 - core index']
  #allocation1 [shape = 'u32[144,128]{1,0:T(1,128)}', space=vmem, size = 0x12000, scoped, tag = 'internal scratch']
  %s0 = inlined_call_operand.vmem [shape: bf16[32,32], index: 0, kind: input, shape index: {}]
  %s1 = inlined_call_operand.vmem [shape: bf16[32,8], index: 1, kind: input, shape index: {}]
  %s2 = inlined_call_operand.vmem [shape: f32[1,8], index: 2, kind: input, shape index: {}]
  %s3 = inlined_call_operand.vmem [shape: s32[32,1], index: 3, kind: input, shape index: {}]
  %s4 = inlined_call_operand.vmem [shape: f32[32,1], index: 4, kind: input, shape index: {}]
  %s5 = inlined_call_operand.vmem [shape: f32[32,8], index: 5, kind: output, shape index: {0}]
  %s6 = inlined_call_operand.vmem [shape: f32[32,8], index: 6, kind: output, shape index: {1}]
  %s7 = inlined_call_operand.vmem [shape: s32[32,1], index: 7, kind: output, shape index: {2}]
  %s8 = inlined_call_operand.hbm [shape: f32[1,1,1], index: 8, kind: output, shape index: {3}]
  %9 = xla_tuple %s5, %s6, %s7, %s8
  %s10 = sld [smem:[#allocation0]]
  $region54: #{tpu_custom_call.1} parent=0
    _
  %s12 = ssub.s32 1, %s10
  %s13 = scalar_select 0, %s12, %s10
  $region1: #{tpu_custom_call.1} parent=0
    #allocation2 [shape = 'u8[512]{0}', space=vmem, size = 0x400, scoped, tag = 'output window, operand 3, single buffered']
    #allocation3 [shape = 's32[1]{0}', space=sflag, size = 0x4, scoped, tag = 'scoped memory for tpu_custom_call.1']
    %14 = vsyncpa [#allocation3], 0
    // Predicated region
    $region2: #{tpu_custom_call.1} parent=1 // pred_check
      _
    $region3: #{tpu_custom_call.1} parent=1 // pred_check_branch
      %16 = sbr.rel (0) target = $region5
    $region4: #{tpu_custom_call.1} parent=1 // pred_region
      _
    $region5: #{tpu_custom_call.1} parent=1 // pred_fallthru
      _
    // Predicated region
    $region6: #{tpu_custom_call.1} parent=1 // pred_check
      _
    $region7: #{tpu_custom_call.1} parent=1 // pred_check_branch
      %18 = sbr.rel (0) target = $region9
    $region8: #{tpu_custom_call.1} parent=1 // pred_region
      _
    $region9: #{tpu_custom_call.1} parent=1 // pred_fallthru
      _
    // Predicated region
    $region10: #{tpu_custom_call.1} parent=1 // pred_check
      _
    $region11: #{tpu_custom_call.1} parent=1 // pred_check_branch
      %20 = sbr.rel (0) target = $region13
    $region12: #{tpu_custom_call.1} parent=1 // pred_region
      _
    $region13: #{tpu_custom_call.1} parent=1 // pred_fallthru
      _
    // Predicated region
    $region14: #{tpu_custom_call.1} parent=1 // pred_check
      _
    $region15: #{tpu_custom_call.1} parent=1 // pred_check_branch
      %22 = sbr.rel (0) target = $region17
    $region16: #{tpu_custom_call.1} parent=1 // pred_region
      _
    $region17: #{tpu_custom_call.1} parent=1 // pred_fallthru
      _
    // Predicated region
    $region18: #{tpu_custom_call.1} parent=1 // pred_check
      _
    $region19: #{tpu_custom_call.1} parent=1 // pred_check_branch
      %24 = sbr.rel (0) target = $region21
    $region20: #{tpu_custom_call.1} parent=1 // pred_region
      _
    $region21: #{tpu_custom_call.1} parent=1 // pred_fallthru
      _
    %v26 = vld [vmem:[%s0] sm:$0xf]
    %v27 = vld [vmem:[%s0 + $0x4] sm:$0xf]
    %v28 = vld [vmem:[%s0 + $0x8] sm:$0xf]
    %v29 = vld [vmem:[%s0 + $0xc] sm:$0xf]
    %v30 = vld [vmem:[%s1] sm:$0xf]
    %v31 = vld [vmem:[%s1 + $0x4] sm:$0xf]
    %v32 = vld [vmem:[%s1 + $0x8] sm:$0xf]
    %v33 = vld [vmem:[%s1 + $0xc] sm:$0xf]
    %v34 = vld [vmem:[%s2] sm:$0x1]
    %v36 = vlaneseq
    %v37 = vshrl.u32 %v36, 7
    %v38 = vsub.s32 0, %v37
    %v39 = vrot.slane %v34, %v38
    %v45 = vunpack.c.l.b16 %v26
    %v46 = vunpack.c.l.b16 %v27
    %v47 = vunpack.c.l.b16 %v28
    %v48 = vunpack.c.l.b16 %v29
    %v49 = vpack.c.b16 %v46, %v45
    %v50 = vpack.c.b16 %v48, %v47
    %v55 = vunpack.c.l.b16 %v30
    %v56 = vunpack.c.l.b16 %v31
    %v57 = vunpack.c.l.b16 %v32
    %v58 = vunpack.c.l.b16 %v33
    %v59 = vpack.c.b16 %v56, %v55
    %v60 = vpack.c.b16 %v58, %v57
    %vm63 = vcmask 261120
    %v65 = vsel %vm63, %v49, 0
    %v68 = vsel %vm63, %v50, 0
    %70 = vmatprep.subr.bf16.mxu0 0
    %71 = vmatpush1.bf16.msra.mxu0 %v59
    %72 = vmatprep.subr.bf16.mxu0 0
    %73 = vmatpush1.bf16.msra.mxu0 %v60
    %74 = vmatprep.subr.bf16.mxu0 0
    %75 = vmatpush1.bf16.msra.mxu0 0
    %76 = vmatprep.subr.bf16.mxu0 0
    %77 = vmatpush1.bf16.msra.mxu0 0
    %78 = vmatprep.subr.bf16.mxu0 0
    %79 = vmatpush1.bf16.msra.mxu0 0
    %80 = vmatprep.subr.bf16.mxu0 0
    %81 = vmatpush1.bf16.msra.mxu0 0
    %82 = vmatprep.subr.bf16.mxu0 0
    %83 = vmatpush1.bf16.msra.mxu0 0
    %84 = vmatprep.subr.bf16.mxu0 0
    %85 = vmatpush1.bf16.msra.mxu0 0
    %86 = vmatprep.subr.bf16.mxu0 0
    %87 = vmatpush1.bf16.msra.mxu0 0
    %88 = vmatprep.subr.bf16.mxu0 0
    %89 = vmatpush1.bf16.msra.mxu0 0
    %90 = vmatprep.subr.bf16.mxu0 0
    %91 = vmatpush1.bf16.msra.mxu0 0
    %92 = vmatprep.subr.bf16.mxu0 0
    %93 = vmatpush1.bf16.msra.mxu0 0
    %94 = vmatprep.subr.bf16.mxu0 0
    %95 = vmatpush1.bf16.msra.mxu0 0
    %96 = vmatprep.subr.bf16.mxu0 0
    %97 = vmatpush1.bf16.msra.mxu0 0
    %98 = vmatprep.subr.bf16.mxu0 0
    %99 = vmatpush1.bf16.msra.mxu0 0
    %100 = vmatprep.subr.bf16.mxu0 0
    %101 = vmatpush1.bf16.msra.mxu0 0
    %102 = vmatprep.mubr.bf16.mxu0 0
    %103 = vmatmul.mubr.bf16.gmra.mrb[0].mxu0 %v65
    %v104 = vpop.f32.mrb[0].mxu0
    %v105 = vadd.f32 %v39, %v104
    %v106 = vpop.f32.mrb[0].mxu0
    %v107 = vpop.f32.mrb[0].mxu0
    %v108 = vadd.f32 %v39, %v107
    %v109 = vpop.f32.mrb[0].mxu0
    %110 = vmatprep.mubr.bf16.mxu0 0
    %111 = vmatmul.mubr.bf16.gmra.mrb[0].mxu0 %v68
    %v112 = vpop.f32.mrb[0].mxu0
    %v113 = vadd.f32 %v39, %v112
    %v114 = vpop.f32.mrb[0].mxu0
    %v115 = vpop.f32.mrb[0].mxu0
    %v116 = vadd.f32 %v39, %v115
    %v117 = vpop.f32.mrb[0].mxu0
    %118 = vdwg.mxu0
    %vm119 = vcmask 64512
    %120 = vst.msk [vmem:[%s5] sm:$0xff] %vm119, %v105
    %121 = vst.msk [vmem:[%s5 + $0x8] sm:$0xff] %vm119, %v108
    %122 = vst.msk [vmem:[%s5 + $0x10] sm:$0xff] %vm119, %v113
    %123 = vst.msk [vmem:[%s5 + $0x18] sm:$0xff] %vm119, %v116
    %v124 = vld [vmem:[%s4] sm:$0xff]
    %v125 = vld [vmem:[%s4 + $0x8] sm:$0xff]
    %v126 = vld [vmem:[%s4 + $0x10] sm:$0xff]
    %v127 = vld [vmem:[%s4 + $0x18] sm:$0xff]
    %v128 = vsel %vm119, %v105, -inf
    %129 = vmax.xlane.f32.xlu0 %v128
    %v130 = vpop.xlane.xlu0 %129
    %v131 = vsel %vm119, %v108, -inf
    %132 = vmax.xlane.f32.xlu0 %v131
    %v133 = vpop.xlane.xlu0 %132
    %v134 = vsel %vm119, %v113, -inf
    %135 = vmax.xlane.f32.xlu0 %v134
    %v136 = vpop.xlane.xlu0 %135
    %v137 = vsel %vm119, %v116, -inf
    %138 = vmax.xlane.f32.xlu0 %v137
    %v139 = vpop.xlane.xlu0 %138
    %v140 = vsub.f32 %v105, %v130
    %v141 = vsub.f32 %v108, %v133
    %v142 = vsub.f32 %v113, %v136
    %v143 = vsub.f32 %v116, %v139
    %v144 = vmul.f32 %v140, 1.442695
    %v145 = vpow.pop %v144
    %v146 = vmul.f32 %v141, 1.442695
    %v147 = vpow.pop %v146
    %v148 = vmul.f32 %v142, 1.442695
    %v149 = vpow.pop %v148
    %v150 = vmul.f32 %v143, 1.442695
    %v151 = vpow.pop %v150
    %v152 = vsel %vm119, %v145, 0.0
    %153 = vadd.xlane.f32.xlu0 %v152
    %v154 = vpop.xlane.xlu0 %153
    %v155 = vsel %vm119, %v147, 0.0
    %156 = vadd.xlane.f32.xlu0 %v155
    %v157 = vpop.xlane.xlu0 %156
    %v158 = vsel %vm119, %v149, 0.0
    %159 = vadd.xlane.f32.xlu0 %v158
    %v160 = vpop.xlane.xlu0 %159
    %v161 = vsel %vm119, %v151, 0.0
    %162 = vadd.xlane.f32.xlu0 %v161
    %v163 = vpop.xlane.xlu0 %162
    %v164 = vrcp.pop %v154
    %v165 = vrcp.pop %v157
    %v166 = vrcp.pop %v160
    %v167 = vrcp.pop %v163
    %v168 = vmul.f32 %v145, %v164
    %v169 = vmul.f32 %v147, %v165
    %v170 = vmul.f32 %v149, %v166
    %v171 = vmul.f32 %v151, %v167
    %173 = vset.pattern.permute.xlu0 0
    %174 = vperm.xlu0 %173, %v124
    %v175 = vpop.permute.xlu0 %174
    %178 = vset.pattern.permute.xlu0 0
    %179 = vperm.xlu0 %178, %v125
    %v180 = vpop.permute.xlu0 %179
    %183 = vset.pattern.permute.xlu0 0
    %184 = vperm.xlu0 %183, %v126
    %v185 = vpop.permute.xlu0 %184
    %188 = vset.pattern.permute.xlu0 0
    %189 = vperm.xlu0 %188, %v127
    %v190 = vpop.permute.xlu0 %189
    %v192 = vmul.f32 %v168, %v175
    %v193 = vmul.f32 %v169, %v180
    %v194 = vmul.f32 %v170, %v185
    %v195 = vmul.f32 %v171, %v190
    %196 = vst.msk [vmem:[%s6] sm:$0xff] %vm119, %v192
    %197 = vst.msk [vmem:[%s6 + $0x8] sm:$0xff] %vm119, %v193
    %198 = vst.msk [vmem:[%s6 + $0x10] sm:$0xff] %vm119, %v194
    %199 = vst.msk [vmem:[%s6 + $0x18] sm:$0xff] %vm119, %v195
    %v200 = vlaneseq
    %v201 = vand.u32 %v200, 127
    %vm202 = vcmp.ge.f32.partialorder %v105, %v130
    %vm203 = vcmp.ge.f32.partialorder %v108, %v133
    %vm204 = vcmp.ge.f32.partialorder %v113, %v136
    %vm205 = vcmp.ge.f32.partialorder %v116, %v139
    %v206 = vcvt.s32.f32 %v201
    %v207 = vsel %vm202, %v206, 8.0
    %v208 = vsel %vm203, %v206, 8.0
    %v209 = vsel %vm204, %v206, 8.0
    %v210 = vsel %vm205, %v206, 8.0
    %v211 = vsel %vm119, %v207, inf
    %212 = vmin.xlane.f32.xlu0 %v211
    %v213 = vpop.xlane.xlu0 %212
    %v214 = vsel %vm119, %v208, inf
    %215 = vmin.xlane.f32.xlu0 %v214
    %v216 = vpop.xlane.xlu0 %215
    %v217 = vsel %vm119, %v209, inf
    %218 = vmin.xlane.f32.xlu0 %v217
    %v219 = vpop.xlane.xlu0 %218
    %v220 = vsel %vm119, %v210, inf
    %221 = vmin.xlane.f32.xlu0 %v220
    %v222 = vpop.xlane.xlu0 %221
    %v223 = vcvt.f32.s32.to.zero.pseudo %v213
    %v224 = vcvt.f32.s32.to.zero.pseudo %v216
    %v225 = vcvt.f32.s32.to.zero.pseudo %v219
    %v226 = vcvt.f32.s32.to.zero.pseudo %v222
    %vm227 = vcmp.gt.f32.partialorder %v124, 0.0
    %vm228 = vcmp.gt.f32.partialorder %v125, 0.0
    %vm229 = vcmp.gt.f32.partialorder %v126, 0.0
    %vm230 = vcmp.gt.f32.partialorder %v127, 0.0
    %v231 = vsel %vm227, %v223, 0
    %v232 = vsel %vm228, %v224, 0
    %v233 = vsel %vm229, %v225, 0
    %v234 = vsel %vm230, %v226, 0
    %vm235 = vcmask 7168
    %236 = vst.msk [vmem:[%s7] sm:$0xff] %vm235, %v231
    %237 = vst.msk [vmem:[%s7 + $0x8] sm:$0xff] %vm235, %v232
    %238 = vst.msk [vmem:[%s7 + $0x10] sm:$0xff] %vm235, %v233
    %239 = vst.msk [vmem:[%s7 + $0x18] sm:$0xff] %vm235, %v234
    %v240 = vlog2.pop %v154
    %v241 = vmul.f32 %v240, 0.6931472
    %v242 = vlog2.pop %v157
    %v243 = vmul.f32 %v242, 0.6931472
    %v244 = vlog2.pop %v160
    %v245 = vmul.f32 %v244, 0.6931472
    %v246 = vlog2.pop %v163
    %v247 = vmul.f32 %v246, 0.6931472
    %v248 = vadd.f32 %v241, %v130
    %v249 = vadd.f32 %v243, %v133
    %v250 = vadd.f32 %v245, %v136
    %v251 = vadd.f32 %v247, %v139
    %v252 = vld [vmem:[%s3] sm:$0xff]
    %v253 = vld [vmem:[%s3 + $0x8] sm:$0xff]
    %v254 = vld [vmem:[%s3 + $0x10] sm:$0xff]
    %v255 = vld [vmem:[%s3 + $0x18] sm:$0xff]
    %256 = vset.pattern.permute.xlu0 0
    %257 = vperm.xlu0 %256, %v252
    %v258 = vpop.permute.xlu0 %257
    %259 = vset.pattern.permute.xlu0 0
    %260 = vperm.xlu0 %259, %v253
    %v261 = vpop.permute.xlu0 %260
    %262 = vset.pattern.permute.xlu0 0
    %263 = vperm.xlu0 %262, %v254
    %v264 = vpop.permute.xlu0 %263
    %265 = vset.pattern.permute.xlu0 0
    %266 = vperm.xlu0 %265, %v255
    %v267 = vpop.permute.xlu0 %266
    %vm268 = vcmp.eq.s32.totalorder %v201, %v258
    %vm269 = vcmp.eq.s32.totalorder %v201, %v261
    %vm270 = vcmp.eq.s32.totalorder %v201, %v264
    %vm271 = vcmp.eq.s32.totalorder %v201, %v267
    %v272 = vsel %vm268, %v105, 0.0
    %v273 = vsel %vm269, %v108, 0.0
    %v274 = vsel %vm270, %v113, 0.0
    %v275 = vsel %vm271, %v116, 0.0
    %v276 = vsel %vm119, %v272, 0.0
    %277 = vadd.xlane.f32.xlu0 %v276
    %v278 = vpop.xlane.xlu0 %277
    %v279 = vsel %vm119, %v273, 0.0
    %280 = vadd.xlane.f32.xlu0 %v279
    %v281 = vpop.xlane.xlu0 %280
    %v282 = vsel %vm119, %v274, 0.0
    %283 = vadd.xlane.f32.xlu0 %v282
    %v284 = vpop.xlane.xlu0 %283
    %v285 = vsel %vm119, %v275, 0.0
    %286 = vadd.xlane.f32.xlu0 %v285
    %v287 = vpop.xlane.xlu0 %286
    %v288 = vsub.f32 %v248, %v278
    %v289 = vsub.f32 %v249, %v281
    %v290 = vsub.f32 %v250, %v284
    %v291 = vsub.f32 %v251, %v287
    %v292 = vmul.f32 %v288, %v124
    %v293 = vmul.f32 %v289, %v125
    %v294 = vmul.f32 %v290, %v126
    %v295 = vmul.f32 %v291, %v127
    %v296 = vsel %vm235, %v292, 0.0
    %v297 = vsel %vm235, %v293, 0.0
    %v298 = vadd.f32 %v296, %v297
    %v299 = vsel %vm235, %v294, 0.0
    %v300 = vadd.f32 %v298, %v299
    %v301 = vsel %vm235, %v295, 0.0
    %v302 = vadd.f32 %v300, %v301
    %303 = vadd.xlane.f32.xlu0 %v302
    %v304 = vpop.xlane.xlu0 %303
    %v305 = vrot.slane %v304, 4
    %v306 = vadd.f32 %v304, %v305
    %v307 = vrot.slane %v306, 2
    %v308 = vadd.f32 %v306, %v307
    %v309 = vrot.slane %v308, 1
    %v310 = vadd.f32 %v308, %v309
    %s311 = vtos %v310
    %v312 = vstv %s311
    %vm313 = vcmask 0
    %314 = vst.msk [vmem:[#allocation2] sm:$0x1] %vm313, %v312
    // Predicated region
    $region22: #{tpu_custom_call.1} parent=1 // pred_check
      _
    $region23: #{tpu_custom_call.1} parent=1 // pred_check_branch
      %316 = sbr.rel (0) target = $region25
    $region24: #{tpu_custom_call.1} parent=1 // pred_region
      _
    $region25: #{tpu_custom_call.1} parent=1 // pred_fallthru
      _
    // Predicated region
    $region26: #{tpu_custom_call.1} parent=1 // pred_check
      _
    $region27: #{tpu_custom_call.1} parent=1 // pred_check_branch
      %318 = sbr.rel (0) target = $region29
    $region28: #{tpu_custom_call.1} parent=1 // pred_region
      _
    $region29: #{tpu_custom_call.1} parent=1 // pred_fallthru
      _
    // Predicated region
    $region30: #{tpu_custom_call.1} parent=1 // pred_check
      _
    $region31: #{tpu_custom_call.1} parent=1 // pred_check_branch
      %320 = sbr.rel (0) target = $region33
    $region32: #{tpu_custom_call.1} parent=1 // pred_region
      _
    $region33: #{tpu_custom_call.1} parent=1 // pred_fallthru
      _
    // Predicated region
    $region34: #{tpu_custom_call.1} parent=1 // pred_check
      _
    $region35: #{tpu_custom_call.1} parent=1 // pred_check_branch
      %322 = sbr.rel (0) target = $region37
    $region36: #{tpu_custom_call.1} parent=1 // pred_region
      %s324 = ssub.s32 16, 16
      %325 = vsyncadd [#allocation3], %s324
      %s327 = sshll.u32 [#allocation2], 4
      %s328 = int_to_ptr.vmem [resolvable:$true] %s327
      %330 = dma.vmem_to_hbm [thread:$0]  %s328, 16, %s8, [#allocation3]
    $region37: #{tpu_custom_call.1} parent=1 // pred_fallthru
      _
    // Predicated region
    $region38: #{tpu_custom_call.1} parent=1 // pred_check
      _
    $region39: #{tpu_custom_call.1} parent=1 // pred_check_branch
      %332 = sbr.rel (0) target = $region41
    $region40: #{tpu_custom_call.1} parent=1 // pred_region
      _
    $region41: #{tpu_custom_call.1} parent=1 // pred_fallthru
      _
    // Predicated region
    $region42: #{tpu_custom_call.1} parent=1 // pred_check
      _
    $region43: #{tpu_custom_call.1} parent=1 // pred_check_branch
      %334 = sbr.rel (0) target = $region45
    $region44: #{tpu_custom_call.1} parent=1 // pred_region
      _
    $region45: #{tpu_custom_call.1} parent=1 // pred_fallthru
      _
    // Predicated region
    $region46: #{tpu_custom_call.1} parent=1 // pred_check
      _
    $region47: #{tpu_custom_call.1} parent=1 // pred_check_branch
      %336 = sbr.rel (0) target = $region49
    $region48: #{tpu_custom_call.1} parent=1 // pred_region
      _
    $region49: #{tpu_custom_call.1} parent=1 // pred_fallthru
      _
    // Predicated region
    $region50: #{tpu_custom_call.1} parent=1 // pred_check
      _
    $region51: #{tpu_custom_call.1} parent=1 // pred_check_branch
      %338 = sbr.rel (0) target = $region53
    $region52: #{tpu_custom_call.1} parent=1 // pred_region
      %339 = dma.done [#allocation3], 16
    $region53: #{tpu_custom_call.1} parent=1 // pred_fallthru
      _
    %340 = vsyncpa [#allocation3], 1

</llo_original>
